<compile_context>
chip_gen: v7x
topology: tpu7x:2x2x1
jax: 0.10.0
libtpu: 0.0.40
codegen_flags: <defaults>
</compile_context>

<pallas_src>
import functools

import jax
import jax.numpy as jnp
from jax.experimental import pallas as pl
from jax.experimental.pallas import tpu as pltpu


def _round_up(x, m):
    return -(-x // m) * m


def _dws_conv_kernel(xlo_ref, xhi_ref, w_ref, o_ref, *, K, dil, Wp, lane_tile):
    """One (batch, lane-tile) step of the fused depthwise-separable conv.

    xlo_ref: (1, C_in, LT)      current lane tile of the zero-padded, flattened image
    xhi_ref: (1, C_in, LT)      next lane tile (supplies the shifted-window halo)
    w_ref:   (C_out, K*K*C_in)  folded weights: w_pw[o, c] * w_dw[c, tap]
    o_ref:   (1, C_out, LT)     lane-dense output tile (wrapper strips padded columns)
    """
    # Contiguous (C_in, 2*LT) tile + halo; every shifted window is a static lane slice.
    x = jnp.concatenate([xlo_ref[0], xhi_ref[0]], axis=-1)

    # im2col: stack the K*K statically shifted flat windows along the channel axis.
    windows = []
    for kh in range(K):
        for kw in range(K):
            off = (kh * Wp + kw) * dil
            windows.append(x[:, off:off + lane_tile])
    patches = jnp.concatenate(windows, axis=0)              # (K*K*C_in, LT)

    # One MXU matmul performs depthwise + pointwise at once (f32 accumulation,
    # default precision -- HIGHEST dropped per perf review).
    out = jnp.dot(w_ref[...], patches, preferred_element_type=jnp.float32)
    o_ref[0] = out.astype(o_ref.dtype)


def depthwise_separable_conv2d(x, w_dw, w_pw, *, stride=1, padding=0, dilation=1,
                               lane_tile=512):
    """NCHW depthwise-separable conv (bias=False), matching the PyTorch module."""
    B, C_in, H, W = x.shape
    c_dw, K, K2 = w_dw.shape
    assert c_dw == C_in and K == K2
    C_out, c_pw = w_pw.shape
    assert c_pw == C_in

    Hp, Wp = H + 2 * padding, W + 2 * padding
    Ho = Hp - dilation * (K - 1)                 # stride-1 output extents
    Wo = Wp - dilation * (K - 1)
    assert Ho >= 1 and Wo >= 1

    KK = K * K
    halo = dilation * (K - 1) * (Wp + 1)         # largest static tap offset
    LT = max(_round_up(lane_tile, 128), _round_up(max(halo, 1), 128))
    n_out = Ho * Wp                              # padded-width flat output; stripped below
    n_tiles = pl.cdiv(n_out, LT)
    flat_in = (n_tiles + 1) * LT                 # +1 tile so the "hi" halo block exists

    # TODO(synk): the spatial zero-pad + flatten + strip are wrapper-side XLA copies; a
    # production kernel would zero-pad inside the kernel (masked loads / zeroed scratch)
    # and emit the (Ho, Wo) layout directly, removing the extra HBM round trips.
    xp = jnp.pad(x, ((0, 0), (0, 0), (padding, padding), (padding, padding)))
    xpf = jnp.pad(xp.reshape(B, C_in, Hp * Wp),
                  ((0, 0), (0, 0), (0, flat_in - Hp * Wp)))

    # Fold depthwise taps into the pointwise weights:
    #   W_eff[o, tap*C_in + c] = w_pw[o, c] * w_dw[c, tap]
    w_dw_flat = w_dw.reshape(C_in, KK).astype(jnp.float32)
    w_eff = w_pw.astype(jnp.float32)[None, :, :] * w_dw_flat.T[:, None, :]  # (KK,Co,Ci)
    w_eff = jnp.transpose(w_eff, (1, 0, 2)).reshape(C_out, KK * C_in)

    kernel = functools.partial(_dws_conv_kernel, K=K, dil=dilation, Wp=Wp, lane_tile=LT)
    flops = 2 * B * n_tiles * LT * C_out * KK * C_in
    bytes_accessed = (2 * xpf.size * xpf.dtype.itemsize              # lo + hi reads
                      + B * C_out * n_tiles * LT * x.dtype.itemsize  # output
                      + w_eff.size * 4)

    out_flat = pl.pallas_call(
        kernel,
        out_shape=jax.ShapeDtypeStruct((B, C_out, n_tiles * LT), x.dtype),
        grid=(B, n_tiles),
        in_specs=[
            pl.BlockSpec((1, C_in, LT), lambda b, t: (b, 0, t)),       # current tile
            pl.BlockSpec((1, C_in, LT), lambda b, t: (b, 0, t + 1)),   # halo tile
            pl.BlockSpec((C_out, KK * C_in), lambda b, t: (0, 0)),     # folded weights
        ],
        out_specs=pl.BlockSpec((1, C_out, LT), lambda b, t: (b, 0, t)),
        compiler_params=pltpu.CompilerParams(
            # Both axes independent -> v7x's two TensorCores split batch x tiles.
            dimension_semantics=("parallel", "parallel"),
        ),
        cost_estimate=pl.CostEstimate(flops=flops, transcendentals=0,
                                      bytes_accessed=bytes_accessed),
    )(xpf, xpf, w_eff)

    # Strip lane-tile padding and the Wp-Wo garbage columns from the flat-shift trick.
    out = out_flat[:, :, :n_out].reshape(B, C_out, Ho, Wp)[:, :, :, :Wo]
    if stride > 1:
        # TODO(synk): stride>1 is subsampled from the stride-1 result; a production
        # kernel would fold the stride into the index_map / column selection instead.
        out = out[:, :, ::stride, ::stride]
    return out


if __name__ == "__main__":
    key = jax.random.PRNGKey(0)
    B, C_in, C_out, H, W, K = 2, 4, 8, 16, 16, 3
    stride, padding, dilation = 1, 1, 1

    k1, k2, k3 = jax.random.split(key, 3)
    x = jax.random.normal(k1, (B, C_in, H, W), dtype=jnp.float32)
    # PyTorch shapes: depthwise weight (C_in, 1, K, K) -> stored here as (C_in, K, K);
    # pointwise weight (C_out, C_in, 1, 1) -> stored as (C_out, C_in).  bias=False.
    w_dw = jax.random.normal(k2, (C_in, K, K), dtype=jnp.float32) / (K * K)
    w_pw = jax.random.normal(k3, (C_out, C_in), dtype=jnp.float32) / C_in

    # lane_tile=256 exercises the multi-tile spatial grid at this small size.
    out = depthwise_separable_conv2d(
        x, w_dw, w_pw, stride=stride, padding=padding, dilation=dilation, lane_tile=256)
    out = jax.block_until_ready(out)

    # Reference: XLA grouped conv + 1x1 conv (what nn.Conv2d computes, bias=False),
    # default precision to match the kernel's default-precision MXU matmul.
    dw_ref = jax.lax.conv_general_dilated(
        x, w_dw[:, None, :, :], window_strides=(stride, stride),
        padding=[(padding, padding), (padding, padding)],
        rhs_dilation=(dilation, dilation),
        dimension_numbers=("NCHW", "OIHW", "NCHW"),
        feature_group_count=C_in)
    ref = jax.lax.conv_general_dilated(
        dw_ref, w_pw[:, :, None, None], window_strides=(1, 1),
        padding=[(0, 0), (0, 0)],
        dimension_numbers=("NCHW", "OIHW", "NCHW"))

    assert out.shape == ref.shape == (B, C_out, H, W)
    # Tolerance covers default (bf16-pass) MXU rounding in both kernel and reference;
    # any structural bug (wrong/missing tap) produces errors well above this.
    err = float(jnp.max(jnp.abs(out - ref)))
    assert jnp.allclose(out, ref, atol=2e-2, rtol=2e-2), err
    print("KERNEL_OK")
</pallas_src>

<mosaic_0001>
module attributes {stable_mosaic.version = 11 : i64} {
  func.func @_dws_conv_kernel(%arg0: i32, %arg1: i32, %arg2: memref<1x4x256xf32, #tpu.memory_space<vmem>>, %arg3: memref<1x4x256xf32, #tpu.memory_space<vmem>>, %arg4: memref<8x36xf32, #tpu.memory_space<vmem>>, %arg5: memref<1x8x256xf32, #tpu.memory_space<vmem>>) attributes {dimension_semantics = [#tpu.dimension_semantics<parallel>, #tpu.dimension_semantics<parallel>], iteration_bounds = array<i64: 2, 2>, scalar_prefetch = 0 : i64, scratch_operands = 0 : i64, tpu.core_type = #tpu.core_type<tc>, window_params = [{transform_indices = @transform_0, window_bounds = array<i64: 1, 4, 256>}, {transform_indices = @transform_1, window_bounds = array<i64: 1, 4, 256>}, {pipeline_mode = #tpu.pipeline_mode<synchronous>, transform_indices = @transform_2, window_bounds = array<i64: 8, 36>}, {transform_indices = @transform_3, window_bounds = array<i64: 1, 8, 256>}]} {
    %c0 = arith.constant 0 : index
    %c0_0 = arith.constant 0 : index
    %c0_1 = arith.constant 0 : index
    %0 = vector.load %arg2[%c0, %c0_0, %c0_1] : memref<1x4x256xf32, #tpu.memory_space<vmem>>, vector<1x4x256xf32>
    %1 = vector.shape_cast %0 : vector<1x4x256xf32> to vector<4x256xf32>
    %c0_2 = arith.constant 0 : index
    %c0_3 = arith.constant 0 : index
    %c0_4 = arith.constant 0 : index
    %2 = vector.load %arg3[%c0_2, %c0_3, %c0_4] : memref<1x4x256xf32, #tpu.memory_space<vmem>>, vector<1x4x256xf32>
    %3 = vector.shape_cast %2 : vector<1x4x256xf32> to vector<4x256xf32>
    %4 = tpu.concatenate %1, %3 in 1 : vector<4x256xf32>, vector<4x256xf32> -> vector<4x512xf32>
    %5 = vector.extract_strided_slice %4 {offsets = [0, 0], sizes = [4, 256], strides = [1, 1]} : vector<4x512xf32> to vector<4x256xf32>
    %6 = vector.extract_strided_slice %4 {offsets = [0, 1], sizes = [4, 256], strides = [1, 1]} : vector<4x512xf32> to vector<4x256xf32>
    %7 = vector.extract_strided_slice %4 {offsets = [0, 2], sizes = [4, 256], strides = [1, 1]} : vector<4x512xf32> to vector<4x256xf32>
    %8 = vector.extract_strided_slice %4 {offsets = [0, 18], sizes = [4, 256], strides = [1, 1]} : vector<4x512xf32> to vector<4x256xf32>
    %9 = vector.extract_strided_slice %4 {offsets = [0, 19], sizes = [4, 256], strides = [1, 1]} : vector<4x512xf32> to vector<4x256xf32>
    %10 = vector.extract_strided_slice %4 {offsets = [0, 20], sizes = [4, 256], strides = [1, 1]} : vector<4x512xf32> to vector<4x256xf32>
    %11 = vector.extract_strided_slice %4 {offsets = [0, 36], sizes = [4, 256], strides = [1, 1]} : vector<4x512xf32> to vector<4x256xf32>
    %12 = vector.extract_strided_slice %4 {offsets = [0, 37], sizes = [4, 256], strides = [1, 1]} : vector<4x512xf32> to vector<4x256xf32>
    %13 = vector.extract_strided_slice %4 {offsets = [0, 38], sizes = [4, 256], strides = [1, 1]} : vector<4x512xf32> to vector<4x256xf32>
    %14 = tpu.concatenate %5, %6, %7, %8, %9, %10, %11, %12, %13 in 0 : vector<4x256xf32>, vector<4x256xf32>, vector<4x256xf32>, vector<4x256xf32>, vector<4x256xf32>, vector<4x256xf32>, vector<4x256xf32>, vector<4x256xf32>, vector<4x256xf32> -> vector<36x256xf32>
    %c0_5 = arith.constant 0 : index
    %c0_6 = arith.constant 0 : index
    %15 = vector.load %arg4[%c0_5, %c0_6] : memref<8x36xf32, #tpu.memory_space<vmem>>, vector<8x36xf32>
    %cst = arith.constant dense<0.000000e+00> : vector<8x256xf32>
    %16 = tpu.matmul %15, %14, %cst {dimension_numbers = #tpu.dot_dimension_numbers<[1], [0], [0], [1], [0, 0, 1, 1], [], []>} : vector<8x36xf32>, vector<36x256xf32>, vector<8x256xf32> -> vector<8x256xf32>
    %c0_7 = arith.constant 0 : index
    %c0_8 = arith.constant 0 : index
    %c0_9 = arith.constant 0 : index
    %17 = vector.load %arg5[%c0_7, %c0_8, %c0_9] : memref<1x8x256xf32, #tpu.memory_space<vmem>>, vector<1x8x256xf32>
    %18 = vector.shape_cast %17 : vector<1x8x256xf32> to vector<8x256xf32>
    %19 = vector.shape_cast %16 : vector<8x256xf32> to vector<1x8x256xf32>
    tpu.vector_store %arg5[%c0_7, %c0_8, %c0_9], %19 {strides = array<i32>} : memref<1x8x256xf32, #tpu.memory_space<vmem>>, vector<1x8x256xf32>,
    return
  }
  func.func @transform_0(%arg0: i32, %arg1: i32) -> (i32, i32, i32) {
    %c0_i32 = arith.constant 0 : i32
    %c0_i32_0 = arith.constant 0 : i32
    return %arg0, %c0_i32, %arg1 : i32, i32, i32
  }
  func.func @transform_1(%arg0: i32, %arg1: i32) -> (i32, i32, i32) {
    %c1_i32 = arith.constant 1 : i32
    %0 = arith.addi %arg1, %c1_i32 : i32
    %c0_i32 = arith.constant 0 : i32
    %c0_i32_0 = arith.constant 0 : i32
    return %arg0, %c0_i32, %0 : i32, i32, i32
  }
  func.func @transform_2(%arg0: i32, %arg1: i32) -> (i32, i32) {
    %c0_i32 = arith.constant 0 : i32
    %c0_i32_0 = arith.constant 0 : i32
    %c0_i32_1 = arith.constant 0 : i32
    return %c0_i32, %c0_i32_0 : i32, i32
  }
  func.func @transform_3(%arg0: i32, %arg1: i32) -> (i32, i32, i32) {
    %c0_i32 = arith.constant 0 : i32
    %c0_i32_0 = arith.constant 0 : i32
    return %arg0, %c0_i32, %arg1 : i32, i32, i32
  }
}

</mosaic_0001>

<llo_original>
// kernel: tpu_custom_call.1
$region0: #{tpu_custom_call.1}
  #allocation0 [shape = 'u32[]', space=smem, size = 0x4, offset = 0x4, fixed_abs, tag = 'smem constant byte address 0x4 - core index']
  #allocation1 [shape = 'u32[144,128]{1,0:T(1,128)}', space=vmem, size = 0x12000, scoped, tag = 'internal scratch']
  %s0 = inlined_call_operand.hbm [shape: f32[2,4,768], index: 0, kind: input, shape index: {}]
  %s1 = inlined_call_operand.hbm [shape: f32[2,4,768], index: 1, kind: input, shape index: {}]
  %s2 = inlined_call_operand.hbm [shape: f32[8,36], index: 2, kind: input, shape index: {}]
  %s3 = inlined_call_operand.hbm [shape: f32[2,8,512], index: 3, kind: output, shape index: {}]
  %s4 = sld [smem:[#allocation0]]
  $region57: #{tpu_custom_call.1} parent=0
    _
  %s6 = ssub.s32 1, %s4
  %s7 = scalar_select 0, %s6, %s4
  $region1: #{tpu_custom_call.1} parent=0
    #allocation2 [shape = 'u8[8192]{0}', space=vmem, size = 0x2000, scoped, tag = 'input window, operand 0']
    #allocation3 [shape = 's32[2]{0}', space=sflag, size = 0x8, scoped, tag = 'scoped memory for tpu_custom_call.1']
    #allocation4 [shape = 's32[2]{0}', space=sflag, size = 0x8, scoped, tag = 'scoped memory for tpu_custom_call.1']
    #allocation5 [shape = 'u8[8192]{0}', space=vmem, size = 0x2000, scoped, tag = 'input window, operand 1']
    #allocation6 [shape = 's32[2]{0}', space=sflag, size = 0x8, scoped, tag = 'scoped memory for tpu_custom_call.1']
    #allocation7 [shape = 'u8[4096]{0}', space=vmem, size = 0x1000, scoped, tag = 'input window, operand 2, single buffered']
    #allocation8 [shape = 'u8[16384]{0}', space=vmem, size = 0x4000, scoped, tag = 'output window, operand 0']
    %8 = vsyncpa [#allocation3], 0
    %s9 = scalar_lea.sflag [#allocation3], 1
    %10 = vsyncpa %s9, 0
    %11 = vsyncpa [#allocation6], 0
    %s12 = scalar_lea.sflag [#allocation6], 1
    %13 = vsyncpa %s12, 0
    %14 = vsyncpa [#allocation4], 0
    %s15 = scalar_lea.sflag [#allocation4], 1
    %16 = vsyncpa %s15, 0
    loop: start=0, step=1, limit=6
    $region2: #{tpu_custom_call.1} parent=1 // loop_pre_header
      _
    $region3: #{tpu_custom_call.1} parent=1 // loop_header
      %s18 = sphi 0, %s22
      %p19 = scmp.ge.s32.totalorder %s18, 6
      %s25 = sphi 0, %s37
      %s26 = sphi 0, %s33
      %s27 = sphi 0, %s25
      %s28 = sphi 0, %s26
      %s29 = sphi 0, %s27
      %s30 = sphi 0, %s28
      %s42 = sphi 0, %s44
      %s45 = sphi 0, %s42
      %s46 = sphi 0, %s45
      %s62 = sphi 0, %s46
      %s72 = sphi 0, %s74
      %s75 = sphi 0, %s72
      %s76 = sphi 0, %s75
      %s92 = sphi 0, %s76
      %s96 = sphi 0, %s96
      %s98 = sphi 0, %s96
      %s99 = sphi 0, %s98
      %s113 = sphi 0, %s99
      %s121 = sphi 0, %s123
      %s124 = sphi 0, %s121
      %s125 = sphi 0, %s124
      %s141 = sphi 0, %s125
    $region4: #{tpu_custom_call.1} parent=1 // loop_header_branch
      %21 = sbr.rel (%p19) target = $region8
    $region5: #{tpu_custom_call.1} parent=1 // loop_body
      %s23 = ssub.s32 %s18, 1
      %s24 = ssub.s32 %s18, 2
      %s31 = sadd.s32 1, %s26
      %p32 = scmp.ge.s32.totalorder %s31, 2
      %s33 = scalar_select %p32, 0, %s31
      %s34 = sadd.s32 1, %s25
      %s35 = scalar_select %p32, %s34, %s25
      %p36 = scmp.ge.s32.totalorder %s35, 2
      %s37 = scalar_select %p36, 0, %s35
      %s38 = ssub.s32 %s25, %s37
      %s39 = ssub.s32 %s26, %s33
      %s40 = sor.u32 %s38, %s39
      %p41 = scmp.eq.s32.totalorder %s40, 0
      %s43 = sadd.s32 %s42, 1
      %s44 = scalar_select %p41, %s42, %s43
      %p47 = pneg %p41
      %p48 = scmp.eq.s32.totalorder %s18, 3
      %p49 = por %p47, %p48
      %p50 = scmp.ne.s32.totalorder %s42, %s45
      %p51 = scmp.eq.s32.totalorder %s18, 0
      %p52 = por %p50, %p51
      %p53 = scmp.ne.s32.totalorder %s42, %s45
      %p54 = scmp.eq.s32.totalorder %s23, 3
      %p55 = por %p53, %p54
      %p56 = scmp.ne.s32.totalorder %s45, %s46
      %p57 = scmp.eq.s32.totalorder %s23, 0
      %p58 = por %p56, %p57
      %p59 = scmp.ne.s32.totalorder %s45, %s46
      %p60 = scmp.eq.s32.totalorder %s24, 3
      %p61 = por %p59, %p60
      %p63 = scmp.ne.s32.totalorder %s46, %s62
      %p64 = scmp.eq.s32.totalorder %s24, 0
      %p65 = por %p63, %p64
      %s66 = sadd.s32 %s26, 1
      %s67 = sadd.s32 %s33, 1
      %s68 = ssub.s32 %s25, %s37
      %s69 = ssub.s32 %s66, %s67
      %s70 = sor.u32 %s68, %s69
      %p71 = scmp.eq.s32.totalorder %s70, 0
      %s73 = sadd.s32 %s72, 1
      %s74 = scalar_select %p71, %s72, %s73
      %p77 = pneg %p71
      %p78 = scmp.eq.s32.totalorder %s18, 3
      %p79 = por %p77, %p78
      %p80 = scmp.ne.s32.totalorder %s72, %s75
      %p81 = scmp.eq.s32.totalorder %s18, 0
      %p82 = por %p80, %p81
      %p83 = scmp.ne.s32.totalorder %s72, %s75
      %p84 = scmp.eq.s32.totalorder %s23, 3
      %p85 = por %p83, %p84
      %p86 = scmp.ne.s32.totalorder %s75, %s76
      %p87 = scmp.eq.s32.totalorder %s23, 0
      %p88 = por %p86, %p87
      %p89 = scmp.ne.s32.totalorder %s75, %s76
      %p90 = scmp.eq.s32.totalorder %s24, 3
      %p91 = por %p89, %p90
      %p93 = scmp.ne.s32.totalorder %s76, %s92
      %p94 = scmp.eq.s32.totalorder %s24, 0
      %p95 = por %p93, %p94
      %s97 = sadd.s32 %s96, 1
      %p100 = scmp.eq.s32.totalorder %s18, 3
      %p101 = scmp.ne.s32.totalorder %s96, %s98
      %p102 = scmp.eq.s32.totalorder %s18, 0
      %p103 = por %p101, %p102
      %p104 = scmp.ne.s32.totalorder %s96, %s98
      %p105 = scmp.eq.s32.totalorder %s23, 3
      %p106 = por %p104, %p105
      %p107 = scmp.ne.s32.totalorder %s98, %s99
      %p108 = scmp.eq.s32.totalorder %s23, 0
      %p109 = por %p107, %p108
      %p110 = scmp.ne.s32.totalorder %s98, %s99
      %p111 = scmp.eq.s32.totalorder %s24, 3
      %p112 = por %p110, %p111
      %p114 = scmp.ne.s32.totalorder %s99, %s113
      %p115 = scmp.eq.s32.totalorder %s24, 0
      %p116 = por %p114, %p115
      %s117 = ssub.s32 %s25, %s37
      %s118 = ssub.s32 %s26, %s33
      %s119 = sor.u32 %s117, %s118
      %p120 = scmp.eq.s32.totalorder %s119, 0
      %s122 = sadd.s32 %s121, 1
      %s123 = scalar_select %p120, %s121, %s122
      %p126 = pneg %p120
      %p127 = scmp.eq.s32.totalorder %s18, 3
      %p128 = por %p126, %p127
      %p129 = scmp.ne.s32.totalorder %s121, %s124
      %p130 = scmp.eq.s32.totalorder %s18, 0
      %p131 = por %p129, %p130
      %p132 = scmp.ne.s32.totalorder %s121, %s124
      %p133 = scmp.eq.s32.totalorder %s23, 3
      %p134 = por %p132, %p133
      %p135 = scmp.ne.s32.totalorder %s124, %s125
      %p136 = scmp.eq.s32.totalorder %s23, 0
      %p137 = por %p135, %p136
      %p138 = scmp.ne.s32.totalorder %s124, %s125
      %p139 = scmp.eq.s32.totalorder %s24, 3
      %p140 = por %p138, %p139
      %p142 = scmp.ne.s32.totalorder %s125, %s141
      %p143 = scmp.eq.s32.totalorder %s24, 0
      %p144 = por %p142, %p143
      %p145 = scmp.le.s32.totalorder 1, %s18
      %p146 = scmp.lt.s32.totalorder %s18, 5
      %p147 = pnand %p145, %p146
      %p148 = pneg %p147
      // Predicated region
      $region9: #{tpu_custom_call.1} parent=5 // pred_check
        _
      $region10: #{tpu_custom_call.1} parent=5 // pred_check_branch
        %150 = sbr.rel (%p147) target = $region12
      $region11: #{tpu_custom_call.1} parent=5 // pred_region
        %s151 = ssub.s32 %s18, 1
        // Predicated region
        $region13: #{tpu_custom_call.1} parent=11 // pred_check
          %p152 = pneg %p109
        $region14: #{tpu_custom_call.1} parent=11 // pred_check_branch
          %154 = sbr.rel (%p152) target = $region16
        $region15: #{tpu_custom_call.1} parent=11 // pred_region
          %s156 = ssub.s32 128, 128
          %157 = vsyncadd [#allocation6], %s156
          %s159 = sshll.u32 [#allocation7], 4
          %s160 = int_to_ptr.vmem [resolvable:$true] %s159
          %162 = dma.hbm_to_vmem [thread:$0]  %s2, 128, %s160, [#allocation6]
        $region16: #{tpu_custom_call.1} parent=11 // pred_fallthru
          _
      $region12: #{tpu_custom_call.1} parent=5 // pred_fallthru
        _
      %p163 = scmp.lt.s32.totalorder %s18, 4
      // Predicated region
      $region17: #{tpu_custom_call.1} parent=5 // pred_check
        %p164 = pneg %p163
      $region18: #{tpu_custom_call.1} parent=5 // pred_check_branch
        %166 = sbr.rel (%p164) target = $region20
      $region19: #{tpu_custom_call.1} parent=5 // pred_region
        // Predicated region
        $region21: #{tpu_custom_call.1} parent=19 // pred_check
          %p167 = pneg %p52
        $region22: #{tpu_custom_call.1} parent=19 // pred_check_branch
          %169 = sbr.rel (%p167) target = $region24
        $region23: #{tpu_custom_call.1} parent=19 // pred_region
          %s170 = sand.u32 %s42, 1
          %s171 = scalar_lea.sflag [#allocation3], %s170
          %s172 = sand.u32 %s42, 1
          %s173 = smul.addr %s172, 8
          %s174 = scalar_lea.vmem [#allocation2], %s173
          %s175 = smul.u32 2, %s26
          %s177 = ssub.s32 128, 128
          %178 = vsyncadd %s171, %s177
          %s179 = smul.addr %s25, 6
          %s180 = sadd.s32 %s175, %s179
          %s181 = smul.addr %s180, 64
          %s182 = scalar_lea.hbm %s0, %s181
          %s184 = sshll.u32 %s174, 4
          %s185 = int_to_ptr.vmem [resolvable:$true] %s184
          %187 = dma.hbm_to_vmem [thread:$0]  %s182, 128, %s185, %s171
        $region24: #{tpu_custom_call.1} parent=19 // pred_fallthru
          _
        // Predicated region
        $region25: #{tpu_custom_call.1} parent=19 // pred_check
          %p188 = pneg %p82
        $region26: #{tpu_custom_call.1} parent=19 // pred_check_branch
          %190 = sbr.rel (%p188) target = $region28
        $region27: #{tpu_custom_call.1} parent=19 // pred_region
          %s191 = sand.u32 %s18, 1
          %s192 = scalar_lea.sflag [#allocation6], %s191
          %s193 = sand.u32 %s72, 1
          %s194 = smul.addr %s193, 8
          %s195 = scalar_lea.vmem [#allocation5], %s194
          %s196 = sadd.s32 %s26, 1
          %s197 = smul.u32 2, %s196
          %s199 = ssub.s32 128, 128
          %200 = vsyncadd %s192, %s199
          %s201 = smul.addr %s25, 6
          %s202 = sadd.s32 %s197, %s201
          %s203 = smul.addr %s202, 64
          %s204 = scalar_lea.hbm %s1, %s203
          %s206 = sshll.u32 %s195, 4
          %s207 = int_to_ptr.vmem [resolvable:$true] %s206
          %209 = dma.hbm_to_vmem [thread:$0]  %s204, 128, %s207, %s192
        $region28: #{tpu_custom_call.1} parent=19 // pred_fallthru
          _
      $region20: #{tpu_custom_call.1} parent=5 // pred_fallthru
        _
      %p210 = scmp.le.s32.totalorder 1, %s18
      %p211 = scmp.lt.s32.totalorder %s18, 5
      %p212 = pnand %p210, %p211
      %p213 = pneg %p212
      // Predicated region
      $region29: #{tpu_custom_call.1} parent=5 // pred_check
        _
      $region30: #{tpu_custom_call.1} parent=5 // pred_check_branch
        %215 = sbr.rel (%p212) target = $region32
      $region31: #{tpu_custom_call.1} parent=5 // pred_region
        %s216 = ssub.s32 %s18, 1
        %s217 = sand.u32 %s45, 1
        %s218 = scalar_lea.sflag [#allocation3], %s217
        %s219 = sand.u32 %s45, 1
        %s220 = smul.addr %s219, 8
        %s221 = scalar_lea.vmem [#allocation2], %s220
        // Predicated region
        $region33: #{tpu_custom_call.1} parent=31 // pred_check
          %p222 = pneg %p58
        $region34: #{tpu_custom_call.1} parent=31 // pred_check_branch
          %224 = sbr.rel (%p222) target = $region36
        $region35: #{tpu_custom_call.1} parent=31 // pred_region
          %225 = dma.done %s218, 128
        $region36: #{tpu_custom_call.1} parent=31 // pred_fallthru
          _
        %s226 = sand.u32 %s23, 1
        %s227 = scalar_lea.sflag [#allocation6], %s226
        %s228 = sand.u32 %s75, 1
        %s229 = smul.addr %s228, 8
        %s230 = scalar_lea.vmem [#allocation5], %s229
        // Predicated region
        $region37: #{tpu_custom_call.1} parent=31 // pred_check
          %p231 = pneg %p88
        $region38: #{tpu_custom_call.1} parent=31 // pred_check_branch
          %233 = sbr.rel (%p231) target = $region40
        $region39: #{tpu_custom_call.1} parent=31 // pred_region
          %234 = dma.done %s227, 128
        $region40: #{tpu_custom_call.1} parent=31 // pred_fallthru
          _
        // Predicated region
        $region41: #{tpu_custom_call.1} parent=31 // pred_check
          %p235 = pneg %p109
        $region42: #{tpu_custom_call.1} parent=31 // pred_check_branch
          %237 = sbr.rel (%p235) target = $region44
        $region43: #{tpu_custom_call.1} parent=31 // pred_region
          %238 = dma.done [#allocation6], 128
        $region44: #{tpu_custom_call.1} parent=31 // pred_fallthru
          _
        %s239 = sand.u32 %s45, 1
        %s240 = scalar_lea.sflag [#allocation3], %s239
        %s241 = sand.u32 %s45, 1
        %s242 = smul.addr %s241, 8
        %s243 = scalar_lea.vmem [#allocation2], %s242
        %p244 = pneg %p58
        %p245 = pneg %p55
        %s246 = sand.u32 %s23, 1
        %s247 = scalar_lea.sflag [#allocation6], %s246
        %s248 = sand.u32 %s75, 1
        %s249 = smul.addr %s248, 8
        %s250 = scalar_lea.vmem [#allocation5], %s249
        %p251 = pneg %p88
        %p252 = pneg %p85
        %p253 = pneg %p109
        %p254 = pneg %p106
        %p255 = pneg %p137
        %p256 = pneg %p134
        %s257 = sand.u32 %s124, 1
        %s258 = scalar_lea.sflag [#allocation4], %s257
        %s259 = sand.u32 %s124, 1
        %s260 = smul.addr %s259, 16
        %s261 = scalar_lea.vmem [#allocation8], %s260
        %s262 = smul.u32 2, %s28
        %s263 = sadd.s32 %s28, 1
        %s264 = smul.u32 2, %s263
        %s265 = smul.u32 2, %s28
        %v266 = vld [vmem:[%s221] sm:$0xff]
        %v267 = vld [vmem:[%s230] sm:$0xff]
        %v269 = vcombine.high %v266, %v266
        %v272 = vrot.slane %v266, 4
        %v273 = vrot.slane %v269, 4
        %v274 = vrot.slane %v267, 4
        %275 = vrot.lane.b32.xlu0 %v272, 127
        %v276 = vpop.permute.xlu0 %275
        %277 = vrot.lane.b32.xlu0 %v273, 127
        %v278 = vpop.permute.xlu0 %277
        %279 = vrot.lane.b32.xlu0 %v274, 127
        %v280 = vpop.permute.xlu0 %279
        %vm281 = vcmask 1039360
        %v282 = vsel %vm281, %v276, %v278
        %v283 = vsel %vm281, %v278, %v280
        %286 = vrot.lane.b32.xlu0 %v266, 126
        %v287 = vpop.permute.xlu0 %286
        %288 = vrot.lane.b32.xlu0 %v269, 126
        %v289 = vpop.permute.xlu0 %288
        %290 = vrot.lane.b32.xlu0 %v267, 126
        %v291 = vpop.permute.xlu0 %290
        %vm292 = vcmask 1031168
        %v293 = vsel %vm292, %v287, %v289
        %v294 = vsel %vm292, %v289, %v291
        %297 = vrot.lane.b32.xlu0 %v272, 110
        %v298 = vpop.permute.xlu0 %297
        %299 = vrot.lane.b32.xlu0 %v273, 110
        %v300 = vpop.permute.xlu0 %299
        %301 = vrot.lane.b32.xlu0 %v274, 110
        %v302 = vpop.permute.xlu0 %301
        %vm303 = vcmask 900096
        %v304 = vsel %vm303, %v298, %v300
        %v305 = vsel %vm303, %v300, %v302
        %308 = vrot.lane.b32.xlu0 %v266, 109
        %v309 = vpop.permute.xlu0 %308
        %310 = vrot.lane.b32.xlu0 %v269, 109
        %v311 = vpop.permute.xlu0 %310
        %312 = vrot.lane.b32.xlu0 %v267, 109
        %v313 = vpop.permute.xlu0 %312
        %vm314 = vcmask 891904
        %v315 = vsel %vm314, %v309, %v311
        %v316 = vsel %vm314, %v311, %v313
        %319 = vrot.lane.b32.xlu0 %v272, 108
        %v320 = vpop.permute.xlu0 %319
        %321 = vrot.lane.b32.xlu0 %v273, 108
        %v322 = vpop.permute.xlu0 %321
        %323 = vrot.lane.b32.xlu0 %v274, 108
        %v324 = vpop.permute.xlu0 %323
        %vm325 = vcmask 883712
        %v326 = vsel %vm325, %v320, %v322
        %v327 = vsel %vm325, %v322, %v324
        %330 = vrot.lane.b32.xlu0 %v266, 92
        %v331 = vpop.permute.xlu0 %330
        %332 = vrot.lane.b32.xlu0 %v269, 92
        %v333 = vpop.permute.xlu0 %332
        %334 = vrot.lane.b32.xlu0 %v267, 92
        %v335 = vpop.permute.xlu0 %334
        %vm336 = vcmask 752640
        %v337 = vsel %vm336, %v331, %v333
        %v338 = vsel %vm336, %v333, %v335
        %341 = vrot.lane.b32.xlu0 %v272, 91
        %v342 = vpop.permute.xlu0 %341
        %343 = vrot.lane.b32.xlu0 %v273, 91
        %v344 = vpop.permute.xlu0 %343
        %345 = vrot.lane.b32.xlu0 %v274, 91
        %v346 = vpop.permute.xlu0 %345
        %vm347 = vcmask 744448
        %v348 = vsel %vm347, %v342, %v344
        %v349 = vsel %vm347, %v344, %v346
        %352 = vrot.lane.b32.xlu0 %v266, 90
        %v353 = vpop.permute.xlu0 %352
        %354 = vrot.lane.b32.xlu0 %v269, 90
        %v355 = vpop.permute.xlu0 %354
        %356 = vrot.lane.b32.xlu0 %v267, 90
        %v357 = vpop.permute.xlu0 %356
        %vm358 = vcmask 736256
        %v359 = vsel %vm358, %v353, %v355
        %v360 = vsel %vm358, %v355, %v357
        %vm361 = vcmask 1043456
        %v362 = vsel %vm361, %v266, %v282
        %v363 = vsel %vm361, %v269, %v283
        %v364 = vsel %vm361, %v293, %v304
        %v365 = vsel %vm361, %v294, %v305
        %v366 = vsel %vm361, %v315, %v326
        %v367 = vsel %vm361, %v316, %v327
        %v368 = vsel %vm361, %v337, %v348
        %v369 = vsel %vm361, %v338, %v349
        %v370 = vld [vmem:[#allocation7] sm:$0xff]
        %vm371 = vcmask 293888
        %v373 = vsel %vm371, %v370, 0
        %v375 = vsel %vm361, %v359, 0
        %v377 = vsel %vm361, %v360, 0
        %379 = vmatprep.subr.mxu0 %v363
        %380 = vmatpush1.msra.mxu0 %v362
        %381 = vmatprep.subr.mxu0 %v365
        %382 = vmatpush1.msra.mxu0 %v364
        %383 = vmatprep.subr.mxu0 %v367
        %384 = vmatpush1.msra.mxu0 %v366
        %385 = vmatprep.subr.mxu0 %v369
        %386 = vmatpush1.msra.mxu0 %v368
        %387 = vmatprep.subr.mxu0 %v377
        %388 = vmatpush1.msra.mxu0 %v375
        %389 = vmatprep.subr.mxu0 0.0
        %390 = vmatpush1.msra.mxu0 0.0
        %391 = vmatprep.subr.mxu0 0.0
        %392 = vmatpush1.msra.mxu0 0.0
        %393 = vmatprep.subr.mxu0 0.0
        %394 = vmatpush1.msra.mxu0 0.0
        %395 = vmatprep.subr.mxu0 0.0
        %396 = vmatpush1.msra.mxu0 0.0
        %397 = vmatprep.subr.mxu0 0.0
        %398 = vmatpush1.msra.mxu0 0.0
        %399 = vmatprep.subr.mxu0 0.0
        %400 = vmatpush1.msra.mxu0 0.0
        %401 = vmatprep.subr.mxu0 0.0
        %402 = vmatpush1.msra.mxu0 0.0
        %403 = vmatprep.subr.mxu0 0.0
        %404 = vmatpush1.msra.mxu0 0.0
        %405 = vmatprep.subr.mxu0 0.0
        %406 = vmatpush1.msra.mxu0 0.0
        %407 = vmatprep.subr.mxu0 0.0
        %408 = vmatpush1.msra.mxu0 0.0
        %409 = vmatprep.subr.mxu0 0.0
        %410 = vmatpush1.msra.mxu0 0.0
        %411 = vmatprep.subr.mxu0 0.0
        %412 = vmatpush1.msra.mxu0 0.0
        %413 = vmatprep.subr.mxu0 0.0
        %414 = vmatpush1.msra.mxu0 0.0
        %415 = vmatprep.subr.mxu0 0.0
        %416 = vmatpush1.msra.mxu0 0.0
        %417 = vmatprep.subr.mxu0 0.0
        %418 = vmatpush1.msra.mxu0 0.0
        %419 = vmatprep.subr.mxu0 0.0
        %420 = vmatpush1.msra.mxu0 0.0
        %421 = vmatprep.subr.mxu0 0.0
        %422 = vmatpush1.msra.mxu0 0.0
        %423 = vmatprep.subr.mxu0 0.0
        %424 = vmatpush1.msra.mxu0 0.0
        %425 = vmatprep.subr.mxu0 0.0
        %426 = vmatpush1.msra.mxu0 0.0
        %427 = vmatprep.subr.mxu0 0.0
        %428 = vmatpush1.msra.mxu0 0.0
        %429 = vmatprep.subr.mxu0 0.0
        %430 = vmatpush1.msra.mxu0 0.0
        %431 = vmatprep.subr.mxu0 0.0
        %432 = vmatpush1.msra.mxu0 0.0
        %433 = vmatprep.subr.mxu0 0.0
        %434 = vmatpush1.msra.mxu0 0.0
        %435 = vmatprep.subr.mxu0 0.0
        %436 = vmatpush1.msra.mxu0 0.0
        %437 = vmatprep.subr.mxu0 0.0
        %438 = vmatpush1.msra.mxu0 0.0
        %439 = vmatprep.subr.mxu0 0.0
        %440 = vmatpush1.msra.mxu0 0.0
        %441 = vmatprep.subr.mxu0 0.0
        %442 = vmatpush1.msra.mxu0 0.0
        %443 = vmatprep.mubr.f32.mxu0 0.0
        %444 = vmatmul.mubr.f32.gmra.mrb[0].mxu0 %v373
        %v445 = vpop.f32.mrb[0].mxu0
        %v446 = vadd.f32 0.0, %v445
        %v447 = vpop.f32.mrb[0].mxu0
        %v448 = vadd.f32 0.0, %v447
        %449 = vdwg.mxu0
        %450 = vst [vmem:[%s261] sm:$0xff] %v446
        %451 = vst [vmem:[%s261 + $0x8] sm:$0xff] %v448
        %s452 = sand.u32 %s124, 1
        %s453 = scalar_lea.sflag [#allocation4], %s452
        %s454 = sand.u32 %s124, 1
        %s455 = smul.addr %s454, 16
        %s456 = scalar_lea.vmem [#allocation8], %s455
        // Predicated region
        $region45: #{tpu_custom_call.1} parent=31 // pred_check
          %p457 = pneg %p134
        $region46: #{tpu_custom_call.1} parent=31 // pred_check_branch
          %459 = sbr.rel (%p457) target = $region48
        $region47: #{tpu_custom_call.1} parent=31 // pred_region
          %s460 = smul.u32 2, %s28
          %s462 = ssub.s32 256, 256
          %463 = vsyncadd %s453, %s462
          %s464 = smul.addr %s27, 4
          %s465 = sadd.s32 %s460, %s464
          %s466 = smul.addr %s465, 128
          %s467 = scalar_lea.hbm %s3, %s466
          %s469 = sshll.u32 %s456, 4
          %s470 = int_to_ptr.vmem [resolvable:$true] %s469
          %472 = dma.vmem_to_hbm [thread:$0]  %s470, 256, %s467, %s453
        $region48: #{tpu_custom_call.1} parent=31 // pred_fallthru
          _
      $region32: #{tpu_custom_call.1} parent=5 // pred_fallthru
        _
      %p473 = scmp.le.s32.totalorder 2, %s18
      // Predicated region
      $region49: #{tpu_custom_call.1} parent=5 // pred_check
        %p474 = pneg %p473
      $region50: #{tpu_custom_call.1} parent=5 // pred_check_branch
        %476 = sbr.rel (%p474) target = $region52
      $region51: #{tpu_custom_call.1} parent=5 // pred_region
        %s477 = ssub.s32 %s18, 2
        // Predicated region
        $region53: #{tpu_custom_call.1} parent=51 // pred_check
          %p478 = pneg %p140
        $region54: #{tpu_custom_call.1} parent=51 // pred_check_branch
          %480 = sbr.rel (%p478) target = $region56
        $region55: #{tpu_custom_call.1} parent=51 // pred_region
          %s481 = sand.u32 %s125, 1
          %s482 = scalar_lea.sflag [#allocation4], %s481
          %s483 = sand.u32 %s125, 1
          %s484 = smul.addr %s483, 16
          %s485 = scalar_lea.vmem [#allocation8], %s484
          %486 = dma.done %s482, 256
        $region56: #{tpu_custom_call.1} parent=51 // pred_fallthru
          _
      $region52: #{tpu_custom_call.1} parent=5 // pred_fallthru
        _
    $region6: #{tpu_custom_call.1} parent=1 // loop_footer
      %s22 = sadd.s32 1, %s18
    $region7: #{tpu_custom_call.1} parent=1 // loop_footer_branch
      %17 = sbr.rel target = $region3
    $region8: #{tpu_custom_call.1} parent=1 // loop_exit
      _
    %487 = vsyncpa [#allocation3], 1
    %s488 = scalar_lea.sflag [#allocation3], 1
    %489 = vsyncpa %s488, 1
    %490 = vsyncpa [#allocation6], 1
    %s491 = scalar_lea.sflag [#allocation6], 1
    %492 = vsyncpa %s491, 1
    %493 = vsyncpa [#allocation4], 1
    %s494 = scalar_lea.sflag [#allocation4], 1
    %495 = vsyncpa %s494, 1

</llo_original>
